<compile_context>
chip_gen: v7x
topology: tpu7x:2x2x1
jax: 0.10.0
libtpu: 0.0.40
codegen_flags: <defaults>
</compile_context>

<pallas_src>
import functools

import jax
import jax.numpy as jnp
from jax import lax
from jax.experimental import pallas as pl
from jax.experimental.pallas import tpu as pltpu


def _round_up(x, m):
    return ((x + m - 1) // m) * m


def _vmem_capacity_bytes():
    # Physical per-core VMEM; fall back to the smallest generation (v7x: 64 MiB).
    try:
        return int(pltpu.get_tpu_info().vmem_capacity_bytes)
    except Exception:
        return 64 * 1024 * 1024


def masklm_mlp_kernel(x_ref, w1_ref, b1_ref, g_ref, beta_ref, w2_ref, b2_ref,
                      o_ref, h_ref):
    # Grid = (i over M tiles [parallel], j over V tiles [arbitrary]).
    # Compute the LayerNorm'd hidden ONCE per M tile, keep it in VMEM scratch
    # (matmul dtype) and reuse it while (H, tile_V) slices of w2 stream over j.
    @pl.when(pl.program_id(1) == 0)
    def _():
        h = jnp.dot(x_ref[...], w1_ref[...], preferred_element_type=jnp.float32)
        h = h + b1_ref[...]
        h = jnp.maximum(h, 0.0)
        # Two-pass LayerNorm stats in f32 (eps = nn.LayerNorm default).
        mean = jnp.mean(h, axis=-1, keepdims=True)
        cen = h - mean
        var = jnp.mean(cen * cen, axis=-1, keepdims=True)
        h = cen * lax.rsqrt(var + 1e-5)
        h = h * g_ref[...] + beta_ref[...]
        h_ref[...] = h.astype(h_ref.dtype)

    # Vocab projection: bf16 operands, f32 accumulate on the MXU, narrow store.
    acc = jnp.dot(h_ref[...], w2_ref[...], preferred_element_type=jnp.float32)
    o_ref[...] = (acc + b2_ref[...]).astype(o_ref.dtype)


def masklm_mlp(masked_x, w1, b1, gamma, beta, w2, b2, *,
               tile_m=1024, tile_v=2048,
               matmul_dtype=jnp.bfloat16, out_dtype=jnp.bfloat16):
    """masked_x: (M, num_inputs) -> (M, vocab_size) via a tiled Pallas kernel."""
    M, D = masked_x.shape
    H = w1.shape[1]
    V = w2.shape[1]

    # M tiles >= 16 so bf16 blocks / scratch satisfy the (16, 128) min tile;
    # V tiles lane-aligned (multiples of 128) and streamed over the grid.
    tile_m = max(16, min(tile_m, _round_up(M, 16)))
    m_pad = _round_up(M, tile_m)
    tile_v = max(128, min(tile_v, _round_up(V, 128)))
    v_pad = _round_up(V, tile_v)

    x = masked_x
    if m_pad != M:
        x = jnp.pad(x, ((0, m_pad - M), (0, 0)))
    w2_p = w2 if v_pad == V else jnp.pad(w2, ((0, 0), (0, v_pad - V)))
    b2_p = b2 if v_pad == V else jnp.pad(b2, ((0, v_pad - V),))

    # Matmul operands in matmul_dtype (bf16 by default); LN params / biases f32.
    x = x.astype(matmul_dtype)
    w1_c = w1.astype(matmul_dtype)
    w2_c = w2_p.astype(matmul_dtype)
    b1_2d = b1.reshape(1, H).astype(jnp.float32)
    g_2d = gamma.reshape(1, H).astype(jnp.float32)
    be_2d = beta.reshape(1, H).astype(jnp.float32)
    b2_2d = b2_p.reshape(1, v_pad).astype(jnp.float32)

    nm = m_pad // tile_m
    nv = v_pad // tile_v

    bpe = jnp.dtype(matmul_dtype).itemsize
    obe = jnp.dtype(out_dtype).itemsize

    # VMEM budget: double-buffered streamed tiles + residents + scratch.
    vmem_est = (
        2 * tile_m * D * bpe             # x tiles
        + 2 * D * H * bpe                # w1 (resident; counted 2x for safety)
        + 2 * H * tile_v * bpe           # w2 stream
        + 2 * tile_m * tile_v * obe      # output tiles
        + tile_m * H * bpe               # h scratch
        + 4 * (3 * H + 2 * tile_v) * 4   # small vectors
    )
    vmem_cap = _vmem_capacity_bytes()
    vmem_limit = int(min(int(0.75 * vmem_cap),
                         max(32 * 1024 * 1024, int(1.5 * vmem_est))))

    cost = pl.CostEstimate(
        flops=2 * m_pad * (D * H + H * v_pad),
        transcendentals=m_pad,
        bytes_accessed=(m_pad * D * bpe          # x read
                        + D * H * bpe            # w1 read
                        + nm * H * v_pad * bpe   # w2 re-streamed once per M tile
                        + m_pad * v_pad * obe    # logits writeback
                        + (3 * H + v_pad) * 4),  # small vectors
    )

    grid_spec = pltpu.PrefetchScalarGridSpec(
        num_scalar_prefetch=0,
        grid=(nm, nv),
        in_specs=[
            pl.BlockSpec((tile_m, D), lambda i, j: (i, 0)),   # x (resident per i)
            pl.BlockSpec((D, H), lambda i, j: (0, 0)),        # w1 (resident)
            pl.BlockSpec((1, H), lambda i, j: (0, 0)),        # b1
            pl.BlockSpec((1, H), lambda i, j: (0, 0)),        # gamma
            pl.BlockSpec((1, H), lambda i, j: (0, 0)),        # beta
            pl.BlockSpec((H, tile_v), lambda i, j: (0, j)),   # w2 (streamed)
            pl.BlockSpec((1, tile_v), lambda i, j: (0, j)),   # b2 (streamed)
        ],
        out_specs=pl.BlockSpec((tile_m, tile_v), lambda i, j: (i, j)),
        scratch_shapes=[pltpu.VMEM((tile_m, H), matmul_dtype)],
    )

    out = pl.pallas_call(
        masklm_mlp_kernel,
        out_shape=jax.ShapeDtypeStruct((m_pad, v_pad), out_dtype),
        grid_spec=grid_spec,
        compiler_params=pltpu.CompilerParams(
            dimension_semantics=("parallel", "arbitrary"),
            vmem_limit_bytes=vmem_limit,
        ),
        cost_estimate=cost,
    )(x, w1_c, b1_2d, g_2d, be_2d, w2_c, b2_2d)

    return out[:M, :V]


def masklm_forward(X, pred_positions, params, *,
                   tile_m=1024, tile_v=2048,
                   matmul_dtype=jnp.bfloat16, out_dtype=jnp.bfloat16):
    """X: (B, S, num_inputs) float32; pred_positions: (B, P) int32.
    Returns (B, P, vocab_size) — same semantics as MaskLM.forward."""
    B = X.shape[0]
    P = pred_positions.shape[1]
    pos_flat = pred_positions.reshape(-1)
    batch_idx = jnp.repeat(jnp.arange(B, dtype=jnp.int32), P)
    masked_X = X[batch_idx, pos_flat]                    # (B*P, num_inputs) glue gather
    out = masklm_mlp(masked_X, *params,
                     tile_m=tile_m, tile_v=tile_v,
                     matmul_dtype=matmul_dtype, out_dtype=out_dtype)
    V = params[-1].shape[0]
    return out.reshape(B, P, V)


def init_masklm_params(key, vocab_size, num_hiddens, num_inputs):
    """Deterministic synthetic weights (shapes per nn.Linear / nn.LayerNorm)."""
    k1, k2, k3, k4 = jax.random.split(key, 4)
    s1 = 1.0 / jnp.sqrt(num_inputs)
    s2 = 1.0 / jnp.sqrt(num_hiddens)
    w1 = jax.random.uniform(k1, (num_inputs, num_hiddens), jnp.float32, -s1, s1)
    b1 = jax.random.uniform(k2, (num_hiddens,), jnp.float32, -s1, s1)
    gamma = jnp.ones((num_hiddens,), jnp.float32)
    beta = jnp.zeros((num_hiddens,), jnp.float32)
    w2 = jax.random.uniform(k3, (num_hiddens, vocab_size), jnp.float32, -s2, s2)
    b2 = jax.random.uniform(k4, (vocab_size,), jnp.float32, -s2, s2)
    return (w1, b1, gamma, beta, w2, b2)


if __name__ == "__main__":
    # Small shapes consistent with the module: num_inputs=768, small vocab/hidden,
    # batch=2, seq=8, 3 predicted positions per sequence.
    vocab_size = 256
    num_hiddens = 128
    num_inputs = 768
    batch, seq = 2, 8

    key = jax.random.PRNGKey(0)
    kx, kp = jax.random.split(key)
    encoded_X = jax.random.normal(kx, (batch, seq, num_inputs), jnp.float32)
    mlm_positions = jnp.array([[1, 5, 2], [6, 1, 5]], dtype=jnp.int32)

    params = init_masklm_params(kp, vocab_size, num_hiddens, num_inputs)

    # Small tile sizes here so the V-streaming / h-scratch reuse path is exercised
    # even at toy vocab size (grid = (1, 2)).
    fwd = jax.jit(functools.partial(masklm_forward, tile_m=16, tile_v=128))
    mlm_Y_hat = fwd(encoded_X, mlm_positions, params)
    jax.block_until_ready(mlm_Y_hat)

    # Reference in plain JAX mirroring the kernel's precision path
    # (bf16 matmul operands, f32 accumulate + LayerNorm, bf16 logits).
    B, P = mlm_positions.shape
    bi = jnp.repeat(jnp.arange(B), P)
    mx = encoded_X[bi, mlm_positions.reshape(-1)]
    w1, b1, g, be, w2, b2 = params
    h = jnp.dot(mx.astype(jnp.bfloat16), w1.astype(jnp.bfloat16),
                preferred_element_type=jnp.float32) + b1
    h = jnp.maximum(h, 0.0)
    mu = h.mean(-1, keepdims=True)
    cen = h - mu
    var = (cen * cen).mean(-1, keepdims=True)
    h = cen * lax.rsqrt(var + 1e-5) * g + be
    logits = jnp.dot(h.astype(jnp.bfloat16), w2.astype(jnp.bfloat16),
                     preferred_element_type=jnp.float32) + b2
    ref = logits.astype(jnp.bfloat16).astype(jnp.float32).reshape(B, P, vocab_size)

    got = mlm_Y_hat.astype(jnp.float32)
    assert mlm_Y_hat.shape == (batch, P, vocab_size)
    assert jnp.allclose(got, ref, atol=1e-2, rtol=1e-2)

    print("KERNEL_OK")
</pallas_src>

<mosaic_0001>
module attributes {stable_mosaic.version = 11 : i64} {
  func.func @masklm_mlp_kernel(%arg0: i32, %arg1: i32, %arg2: memref<16x768xbf16, #tpu.memory_space<vmem>>, %arg3: memref<768x128xbf16, #tpu.memory_space<vmem>>, %arg4: memref<1x128xf32, #tpu.memory_space<vmem>>, %arg5: memref<1x128xf32, #tpu.memory_space<vmem>>, %arg6: memref<1x128xf32, #tpu.memory_space<vmem>>, %arg7: memref<128x128xbf16, #tpu.memory_space<vmem>>, %arg8: memref<1x128xf32, #tpu.memory_space<vmem>>, %arg9: memref<16x128xbf16, #tpu.memory_space<vmem>>, %arg10: memref<16x128xbf16, #tpu.memory_space<vmem>>) attributes {dimension_semantics = [#tpu.dimension_semantics<parallel>, #tpu.dimension_semantics<arbitrary>], iteration_bounds = array<i64: 1, 2>, scalar_prefetch = 0 : i64, scratch_operands = 1 : i64, tpu.core_type = #tpu.core_type<tc>, window_params = [{transform_indices = @transform_0, window_bounds = array<i64: 16, 768>}, {pipeline_mode = #tpu.pipeline_mode<synchronous>, transform_indices = @transform_1, window_bounds = array<i64: 768, 128>}, {pipeline_mode = #tpu.pipeline_mode<synchronous>, transform_indices = @transform_2, window_bounds = array<i64: 1, 128>}, {pipeline_mode = #tpu.pipeline_mode<synchronous>, transform_indices = @transform_3, window_bounds = array<i64: 1, 128>}, {pipeline_mode = #tpu.pipeline_mode<synchronous>, transform_indices = @transform_4, window_bounds = array<i64: 1, 128>}, {transform_indices = @transform_5, window_bounds = array<i64: 128, 128>}, {transform_indices = @transform_6, window_bounds = array<i64: 1, 128>}, {transform_indices = @transform_7, window_bounds = array<i64: 16, 128>}]} {
    %c0_i32 = arith.constant 0 : i32
    %0 = arith.cmpi eq, %arg1, %c0_i32 : i32
    %1 = arith.extui %0 : i1 to i32
    %c0_i32_0 = arith.constant 0 : i32
    %2 = arith.cmpi ne, %1, %c0_i32_0 : i32
    scf.if %2 {
      %c0_8 = arith.constant 0 : index
      %c0_9 = arith.constant 0 : index
      %11 = vector.load %arg2[%c0_8, %c0_9] : memref<16x768xbf16, #tpu.memory_space<vmem>>, vector<16x768xbf16>
      %c0_10 = arith.constant 0 : index
      %c0_11 = arith.constant 0 : index
      %12 = vector.load %arg3[%c0_10, %c0_11] : memref<768x128xbf16, #tpu.memory_space<vmem>>, vector<768x128xbf16>
      %cst_12 = arith.constant dense<0.000000e+00> : vector<16x128xf32>
      %13 = tpu.matmul %11, %12, %cst_12 {dimension_numbers = #tpu.dot_dimension_numbers<[1], [0], [0], [1], [0, 0, 1, 1], [], []>} : vector<16x768xbf16>, vector<768x128xbf16>, vector<16x128xf32> -> vector<16x128xf32>
      %c0_13 = arith.constant 0 : index
      %c0_14 = arith.constant 0 : index
      %14 = vector.load %arg4[%c0_13, %c0_14] : memref<1x128xf32, #tpu.memory_space<vmem>>, vector<1x128xf32>
      %15 = vector.broadcast %14 : vector<1x128xf32> to vector<16x128xf32>
      %16 = arith.addf %13, %15 : vector<16x128xf32>
      %cst_15 = arith.constant 0.000000e+00 : f32
      %17 = vector.broadcast %cst_15 : f32 to vector<16x128xf32>
      %18 = arith.maximumf %16, %17 : vector<16x128xf32>
      %cst_16 = arith.constant dense<0.000000e+00> : vector<16xf32>
      %19 = vector.multi_reduction <add>, %18, %cst_16 [1] : vector<16x128xf32> to vector<16xf32>
      %20 = vector.shape_cast %19 : vector<16xf32> to vector<16x1xf32>
      %cst_17 = arith.constant 1.280000e+02 : f32
      %21 = vector.broadcast %cst_17 : f32 to vector<16x1xf32>
      %22 = arith.divf %20, %21 : vector<16x1xf32>
      %23 = vector.broadcast %22 : vector<16x1xf32> to vector<16x128xf32>
      %24 = arith.subf %18, %23 : vector<16x128xf32>
      %25 = arith.mulf %24, %24 : vector<16x128xf32>
      %cst_18 = arith.constant dense<0.000000e+00> : vector<16xf32>
      %26 = vector.multi_reduction <add>, %25, %cst_18 [1] : vector<16x128xf32> to vector<16xf32>
      %27 = vector.shape_cast %26 : vector<16xf32> to vector<16x1xf32>
      %cst_19 = arith.constant 1.280000e+02 : f32
      %28 = vector.broadcast %cst_19 : f32 to vector<16x1xf32>
      %29 = arith.divf %27, %28 : vector<16x1xf32>
      %cst_20 = arith.constant 9.99999974E-6 : f32
      %30 = vector.broadcast %cst_20 : f32 to vector<16x1xf32>
      %31 = arith.addf %29, %30 : vector<16x1xf32>
      %32 = math.rsqrt %31 : vector<16x1xf32>
      %33 = vector.broadcast %32 : vector<16x1xf32> to vector<16x128xf32>
      %34 = arith.mulf %24, %33 : vector<16x128xf32>
      %c0_21 = arith.constant 0 : index
      %c0_22 = arith.constant 0 : index
      %35 = vector.load %arg5[%c0_21, %c0_22] : memref<1x128xf32, #tpu.memory_space<vmem>>, vector<1x128xf32>
      %36 = vector.broadcast %35 : vector<1x128xf32> to vector<16x128xf32>
      %37 = arith.mulf %34, %36 : vector<16x128xf32>
      %c0_23 = arith.constant 0 : index
      %c0_24 = arith.constant 0 : index
      %38 = vector.load %arg6[%c0_23, %c0_24] : memref<1x128xf32, #tpu.memory_space<vmem>>, vector<1x128xf32>
      %39 = vector.broadcast %38 : vector<1x128xf32> to vector<16x128xf32>
      %40 = arith.addf %37, %39 : vector<16x128xf32>
      %41 = arith.truncf %40 : vector<16x128xf32> to vector<16x128xbf16>
      %c0_25 = arith.constant 0 : index
      %c0_26 = arith.constant 0 : index
      %42 = vector.load %arg10[%c0_25, %c0_26] : memref<16x128xbf16, #tpu.memory_space<vmem>>, vector<16x128xbf16>
      tpu.vector_store %arg10[%c0_25, %c0_26], %41 {strides = array<i32>} : memref<16x128xbf16, #tpu.memory_space<vmem>>, vector<16x128xbf16>,
    } else {
    }
    %c0 = arith.constant 0 : index
    %c0_1 = arith.constant 0 : index
    %3 = vector.load %arg10[%c0, %c0_1] : memref<16x128xbf16, #tpu.memory_space<vmem>>, vector<16x128xbf16>
    %c0_2 = arith.constant 0 : index
    %c0_3 = arith.constant 0 : index
    %4 = vector.load %arg7[%c0_2, %c0_3] : memref<128x128xbf16, #tpu.memory_space<vmem>>, vector<128x128xbf16>
    %cst = arith.constant dense<0.000000e+00> : vector<16x128xf32>
    %5 = tpu.matmul %3, %4, %cst {dimension_numbers = #tpu.dot_dimension_numbers<[1], [0], [0], [1], [0, 0, 1, 1], [], []>} : vector<16x128xbf16>, vector<128x128xbf16>, vector<16x128xf32> -> vector<16x128xf32>
    %c0_4 = arith.constant 0 : index
    %c0_5 = arith.constant 0 : index
    %6 = vector.load %arg8[%c0_4, %c0_5] : memref<1x128xf32, #tpu.memory_space<vmem>>, vector<1x128xf32>
    %7 = vector.broadcast %6 : vector<1x128xf32> to vector<16x128xf32>
    %8 = arith.addf %5, %7 : vector<16x128xf32>
    %9 = arith.truncf %8 : vector<16x128xf32> to vector<16x128xbf16>
    %c0_6 = arith.constant 0 : index
    %c0_7 = arith.constant 0 : index
    %10 = vector.load %arg9[%c0_6, %c0_7] : memref<16x128xbf16, #tpu.memory_space<vmem>>, vector<16x128xbf16>
    tpu.vector_store %arg9[%c0_6, %c0_7], %9 {strides = array<i32>} : memref<16x128xbf16, #tpu.memory_space<vmem>>, vector<16x128xbf16>,
    return
  }
  func.func @transform_0(%arg0: i32, %arg1: i32) -> (i32, i32) {
    %c0_i32 = arith.constant 0 : i32
    %c0_i32_0 = arith.constant 0 : i32
    return %arg0, %c0_i32 : i32, i32
  }
  func.func @transform_1(%arg0: i32, %arg1: i32) -> (i32, i32) {
    %c0_i32 = arith.constant 0 : i32
    %c0_i32_0 = arith.constant 0 : i32
    %c0_i32_1 = arith.constant 0 : i32
    return %c0_i32, %c0_i32_0 : i32, i32
  }
  func.func @transform_2(%arg0: i32, %arg1: i32) -> (i32, i32) {
    %c0_i32 = arith.constant 0 : i32
    %c0_i32_0 = arith.constant 0 : i32
    %c0_i32_1 = arith.constant 0 : i32
    return %c0_i32, %c0_i32_0 : i32, i32
  }
  func.func @transform_3(%arg0: i32, %arg1: i32) -> (i32, i32) {
    %c0_i32 = arith.constant 0 : i32
    %c0_i32_0 = arith.constant 0 : i32
    %c0_i32_1 = arith.constant 0 : i32
    return %c0_i32, %c0_i32_0 : i32, i32
  }
  func.func @transform_4(%arg0: i32, %arg1: i32) -> (i32, i32) {
    %c0_i32 = arith.constant 0 : i32
    %c0_i32_0 = arith.constant 0 : i32
    %c0_i32_1 = arith.constant 0 : i32
    return %c0_i32, %c0_i32_0 : i32, i32
  }
  func.func @transform_5(%arg0: i32, %arg1: i32) -> (i32, i32) {
    %c0_i32 = arith.constant 0 : i32
    %c0_i32_0 = arith.constant 0 : i32
    return %c0_i32, %arg1 : i32, i32
  }
  func.func @transform_6(%arg0: i32, %arg1: i32) -> (i32, i32) {
    %c0_i32 = arith.constant 0 : i32
    %c0_i32_0 = arith.constant 0 : i32
    return %c0_i32, %arg1 : i32, i32
  }
  func.func @transform_7(%arg0: i32, %arg1: i32) -> (i32, i32) {
    %c0_i32 = arith.constant 0 : i32
    return %arg0, %arg1 : i32, i32
  }
}

</mosaic_0001>

<llo_original>
// kernel: masklm_forward.1
$region0: #{masklm_forward.1}
  #allocation0 [shape = 'u32[]', space=smem, size = 0x4, offset = 0x4, fixed_abs, tag = 'smem constant byte address 0x4 - core index']
  #allocation1 [shape = 'u32[144,128]{1,0:T(1,128)}', space=vmem, size = 0x12000, scoped, tag = 'internal scratch']
  #allocation2 [shape = 'bf16[16,128]{1,0:T(16,128)(2,1)}', space=vmem, size = 0x1000, scoped, tag = 'scratch operand']
  %s0 = inlined_call_operand.vmem [shape: bf16[16,768], index: 0, kind: input, shape index: {}]
  %s1 = inlined_call_operand.vmem [shape: bf16[768,128], index: 1, kind: input, shape index: {}]
  %s2 = inlined_call_operand.vmem [shape: f32[1,128], index: 2, kind: input, shape index: {}]
  %s3 = inlined_call_operand.vmem [shape: f32[1,128], index: 3, kind: input, shape index: {}]
  %s4 = inlined_call_operand.vmem [shape: f32[1,128], index: 4, kind: input, shape index: {}]
  %s5 = inlined_call_operand.vmem [shape: bf16[128,256], index: 5, kind: input, shape index: {}]
  %s6 = inlined_call_operand.vmem [shape: f32[1,256], index: 6, kind: input, shape index: {}]
  %s7 = inlined_call_operand.vmem [shape: bf16[16,256], index: 7, kind: output, shape index: {}]
  %s8 = sld [smem:[#allocation0]]
  $region143: #{masklm_forward.1} parent=0
    _
  %s10 = ssub.s32 1, %s8
  %s11 = scalar_select 0, %s10, %s8
  $region1: #{masklm_forward.1} parent=0
    #allocation3 [shape = 'u8[65536]{0}', space=vmem, size = 0x10000, scoped, tag = 'input window, operand 5']
    #allocation4 [shape = 'u8[8192]{0}', space=vmem, size = 0x2000, scoped, tag = 'output window, operand 0']
    loop: start=0, step=1, limit=4
    $region2: #{masklm_forward.1} parent=1 // loop_pre_header
      _
    $region3: #{masklm_forward.1} parent=1 // loop_header
      %s13 = sphi 0, %s17
      %p14 = scmp.ge.s32.totalorder %s13, 4
      %s20 = sphi 0, %s32
      %s21 = sphi 0, %s28
      %s22 = sphi 0, %s20
      %s23 = sphi 0, %s21
      %s24 = sphi 0, %s22
      %s25 = sphi 0, %s23
      %s35 = sphi 0, %s37
      %s38 = sphi 0, %s35
      %s39 = sphi 0, %s38
      %s55 = sphi 0, %s39
      %s59 = sphi 0, %s59
      %s61 = sphi 0, %s59
      %s62 = sphi 0, %s61
      %s76 = sphi 0, %s62
      %s80 = sphi 0, %s80
      %s82 = sphi 0, %s80
      %s83 = sphi 0, %s82
      %s97 = sphi 0, %s83
      %s101 = sphi 0, %s101
      %s103 = sphi 0, %s101
      %s104 = sphi 0, %s103
      %s118 = sphi 0, %s104
      %s122 = sphi 0, %s122
      %s124 = sphi 0, %s122
      %s125 = sphi 0, %s124
      %s139 = sphi 0, %s125
      %s145 = sphi 0, %s147
      %s148 = sphi 0, %s145
      %s149 = sphi 0, %s148
      %s165 = sphi 0, %s149
      %s171 = sphi 0, %s173
      %s174 = sphi 0, %s171
      %s175 = sphi 0, %s174
      %s191 = sphi 0, %s175
      %s199 = sphi 0, %s201
      %s202 = sphi 0, %s199
      %s203 = sphi 0, %s202
      %s219 = sphi 0, %s203
    $region4: #{masklm_forward.1} parent=1 // loop_header_branch
      %16 = sbr.rel (%p14) target = $region8
    $region5: #{masklm_forward.1} parent=1 // loop_body
      %s18 = ssub.s32 %s13, 1
      %s19 = ssub.s32 %s13, 2
      %s26 = sadd.s32 1, %s21
      %p27 = scmp.ge.s32.totalorder %s26, 2
      %s28 = scalar_select %p27, 0, %s26
      %s29 = sadd.s32 1, %s20
      %s30 = scalar_select %p27, %s29, %s20
      %p31 = scmp.ge.s32.totalorder %s30, 1
      %s32 = scalar_select %p31, 0, %s30
      %s33 = ssub.s32 %s20, %s32
      %p34 = scmp.eq.s32.totalorder %s33, 0
      %s36 = sadd.s32 %s35, 1
      %s37 = scalar_select %p34, %s35, %s36
      %p40 = pneg %p34
      %p41 = scmp.eq.s32.totalorder %s13, 1
      %p42 = por %p40, %p41
      %p43 = scmp.ne.s32.totalorder %s35, %s38
      %p44 = scmp.eq.s32.totalorder %s13, 0
      %p45 = por %p43, %p44
      %p46 = scmp.ne.s32.totalorder %s35, %s38
      %p47 = scmp.eq.s32.totalorder %s18, 1
      %p48 = por %p46, %p47
      %p49 = scmp.ne.s32.totalorder %s38, %s39
      %p50 = scmp.eq.s32.totalorder %s18, 0
      %p51 = por %p49, %p50
      %p52 = scmp.ne.s32.totalorder %s38, %s39
      %p53 = scmp.eq.s32.totalorder %s19, 1
      %p54 = por %p52, %p53
      %p56 = scmp.ne.s32.totalorder %s39, %s55
      %p57 = scmp.eq.s32.totalorder %s19, 0
      %p58 = por %p56, %p57
      %s60 = sadd.s32 %s59, 1
      %p63 = scmp.eq.s32.totalorder %s13, 1
      %p64 = scmp.ne.s32.totalorder %s59, %s61
      %p65 = scmp.eq.s32.totalorder %s13, 0
      %p66 = por %p64, %p65
      %p67 = scmp.ne.s32.totalorder %s59, %s61
      %p68 = scmp.eq.s32.totalorder %s18, 1
      %p69 = por %p67, %p68
      %p70 = scmp.ne.s32.totalorder %s61, %s62
      %p71 = scmp.eq.s32.totalorder %s18, 0
      %p72 = por %p70, %p71
      %p73 = scmp.ne.s32.totalorder %s61, %s62
      %p74 = scmp.eq.s32.totalorder %s19, 1
      %p75 = por %p73, %p74
      %p77 = scmp.ne.s32.totalorder %s62, %s76
      %p78 = scmp.eq.s32.totalorder %s19, 0
      %p79 = por %p77, %p78
      %s81 = sadd.s32 %s80, 1
      %p84 = scmp.eq.s32.totalorder %s13, 1
      %p85 = scmp.ne.s32.totalorder %s80, %s82
      %p86 = scmp.eq.s32.totalorder %s13, 0
      %p87 = por %p85, %p86
      %p88 = scmp.ne.s32.totalorder %s80, %s82
      %p89 = scmp.eq.s32.totalorder %s18, 1
      %p90 = por %p88, %p89
      %p91 = scmp.ne.s32.totalorder %s82, %s83
      %p92 = scmp.eq.s32.totalorder %s18, 0
      %p93 = por %p91, %p92
      %p94 = scmp.ne.s32.totalorder %s82, %s83
      %p95 = scmp.eq.s32.totalorder %s19, 1
      %p96 = por %p94, %p95
      %p98 = scmp.ne.s32.totalorder %s83, %s97
      %p99 = scmp.eq.s32.totalorder %s19, 0
      %p100 = por %p98, %p99
      %s102 = sadd.s32 %s101, 1
      %p105 = scmp.eq.s32.totalorder %s13, 1
      %p106 = scmp.ne.s32.totalorder %s101, %s103
      %p107 = scmp.eq.s32.totalorder %s13, 0
      %p108 = por %p106, %p107
      %p109 = scmp.ne.s32.totalorder %s101, %s103
      %p110 = scmp.eq.s32.totalorder %s18, 1
      %p111 = por %p109, %p110
      %p112 = scmp.ne.s32.totalorder %s103, %s104
      %p113 = scmp.eq.s32.totalorder %s18, 0
      %p114 = por %p112, %p113
      %p115 = scmp.ne.s32.totalorder %s103, %s104
      %p116 = scmp.eq.s32.totalorder %s19, 1
      %p117 = por %p115, %p116
      %p119 = scmp.ne.s32.totalorder %s104, %s118
      %p120 = scmp.eq.s32.totalorder %s19, 0
      %p121 = por %p119, %p120
      %s123 = sadd.s32 %s122, 1
      %p126 = scmp.eq.s32.totalorder %s13, 1
      %p127 = scmp.ne.s32.totalorder %s122, %s124
      %p128 = scmp.eq.s32.totalorder %s13, 0
      %p129 = por %p127, %p128
      %p130 = scmp.ne.s32.totalorder %s122, %s124
      %p131 = scmp.eq.s32.totalorder %s18, 1
      %p132 = por %p130, %p131
      %p133 = scmp.ne.s32.totalorder %s124, %s125
      %p134 = scmp.eq.s32.totalorder %s18, 0
      %p135 = por %p133, %p134
      %p136 = scmp.ne.s32.totalorder %s124, %s125
      %p137 = scmp.eq.s32.totalorder %s19, 1
      %p138 = por %p136, %p137
      %p140 = scmp.ne.s32.totalorder %s125, %s139
      %p141 = scmp.eq.s32.totalorder %s19, 0
      %p142 = por %p140, %p141
      %s143 = ssub.s32 %s21, %s28
      %p144 = scmp.eq.s32.totalorder %s143, 0
      %s146 = sadd.s32 %s145, 1
      %s147 = scalar_select %p144, %s145, %s146
      %p150 = pneg %p144
      %p151 = scmp.eq.s32.totalorder %s13, 1
      %p152 = por %p150, %p151
      %p153 = scmp.ne.s32.totalorder %s145, %s148
      %p154 = scmp.eq.s32.totalorder %s13, 0
      %p155 = por %p153, %p154
      %p156 = scmp.ne.s32.totalorder %s145, %s148
      %p157 = scmp.eq.s32.totalorder %s18, 1
      %p158 = por %p156, %p157
      %p159 = scmp.ne.s32.totalorder %s148, %s149
      %p160 = scmp.eq.s32.totalorder %s18, 0
      %p161 = por %p159, %p160
      %p162 = scmp.ne.s32.totalorder %s148, %s149
      %p163 = scmp.eq.s32.totalorder %s19, 1
      %p164 = por %p162, %p163
      %p166 = scmp.ne.s32.totalorder %s149, %s165
      %p167 = scmp.eq.s32.totalorder %s19, 0
      %p168 = por %p166, %p167
      %s169 = ssub.s32 %s21, %s28
      %p170 = scmp.eq.s32.totalorder %s169, 0
      %s172 = sadd.s32 %s171, 1
      %s173 = scalar_select %p170, %s171, %s172
      %p176 = pneg %p170
      %p177 = scmp.eq.s32.totalorder %s13, 1
      %p178 = por %p176, %p177
      %p179 = scmp.ne.s32.totalorder %s171, %s174
      %p180 = scmp.eq.s32.totalorder %s13, 0
      %p181 = por %p179, %p180
      %p182 = scmp.ne.s32.totalorder %s171, %s174
      %p183 = scmp.eq.s32.totalorder %s18, 1
      %p184 = por %p182, %p183
      %p185 = scmp.ne.s32.totalorder %s174, %s175
      %p186 = scmp.eq.s32.totalorder %s18, 0
      %p187 = por %p185, %p186
      %p188 = scmp.ne.s32.totalorder %s174, %s175
      %p189 = scmp.eq.s32.totalorder %s19, 1
      %p190 = por %p188, %p189
      %p192 = scmp.ne.s32.totalorder %s175, %s191
      %p193 = scmp.eq.s32.totalorder %s19, 0
      %p194 = por %p192, %p193
      %s195 = ssub.s32 %s20, %s32
      %s196 = ssub.s32 %s21, %s28
      %s197 = sor.u32 %s195, %s196
      %p198 = scmp.eq.s32.totalorder %s197, 0
      %s200 = sadd.s32 %s199, 1
      %s201 = scalar_select %p198, %s199, %s200
      %p204 = pneg %p198
      %p205 = scmp.eq.s32.totalorder %s13, 1
      %p206 = por %p204, %p205
      %p207 = scmp.ne.s32.totalorder %s199, %s202
      %p208 = scmp.eq.s32.totalorder %s13, 0
      %p209 = por %p207, %p208
      %p210 = scmp.ne.s32.totalorder %s199, %s202
      %p211 = scmp.eq.s32.totalorder %s18, 1
      %p212 = por %p210, %p211
      %p213 = scmp.ne.s32.totalorder %s202, %s203
      %p214 = scmp.eq.s32.totalorder %s18, 0
      %p215 = por %p213, %p214
      %p216 = scmp.ne.s32.totalorder %s202, %s203
      %p217 = scmp.eq.s32.totalorder %s19, 1
      %p218 = por %p216, %p217
      %p220 = scmp.ne.s32.totalorder %s203, %s219
      %p221 = scmp.eq.s32.totalorder %s19, 0
      %p222 = por %p220, %p221
      %p223 = scmp.le.s32.totalorder 1, %s13
      %p224 = scmp.lt.s32.totalorder %s13, 3
      %p225 = pnand %p223, %p224
      %p226 = pneg %p225
      // Predicated region
      $region9: #{masklm_forward.1} parent=5 // pred_check
        _
      $region10: #{masklm_forward.1} parent=5 // pred_check_branch
        %228 = sbr.rel (%p225) target = $region12
      $region11: #{masklm_forward.1} parent=5 // pred_region
        %s229 = ssub.s32 %s13, 1
        // Predicated region
        $region13: #{masklm_forward.1} parent=11 // pred_check
          %p230 = pneg %p51
        $region14: #{masklm_forward.1} parent=11 // pred_check_branch
          %232 = sbr.rel (%p230) target = $region16
        $region15: #{masklm_forward.1} parent=11 // pred_region
          %s233 = smul.u32 2, %s22
          %p234 = scmp.lt.s32.totalorder %s233, 1
          %s235 = scalar_select %p234, %s233, 1
          %s236 = smul.addr %s235, 6
          %s237 = smul.addr %s236, 4
          %s238 = scalar_lea.vmem %s0, %s237
          %s239 = smul.u32 2, %s22
        $region16: #{masklm_forward.1} parent=11 // pred_fallthru
          _
        // Predicated region
        $region17: #{masklm_forward.1} parent=11 // pred_check
          %p240 = pneg %p72
        $region18: #{masklm_forward.1} parent=11 // pred_check_branch
          %242 = sbr.rel (%p240) target = $region20
        $region19: #{masklm_forward.1} parent=11 // pred_region
          _
        $region20: #{masklm_forward.1} parent=11 // pred_fallthru
          _
        // Predicated region
        $region21: #{masklm_forward.1} parent=11 // pred_check
          %p243 = pneg %p93
        $region22: #{masklm_forward.1} parent=11 // pred_check_branch
          %245 = sbr.rel (%p243) target = $region24
        $region23: #{masklm_forward.1} parent=11 // pred_region
          _
        $region24: #{masklm_forward.1} parent=11 // pred_fallthru
          _
        // Predicated region
        $region25: #{masklm_forward.1} parent=11 // pred_check
          %p246 = pneg %p114
        $region26: #{masklm_forward.1} parent=11 // pred_check_branch
          %248 = sbr.rel (%p246) target = $region28
        $region27: #{masklm_forward.1} parent=11 // pred_region
          _
        $region28: #{masklm_forward.1} parent=11 // pred_fallthru
          _
        // Predicated region
        $region29: #{masklm_forward.1} parent=11 // pred_check
          %p249 = pneg %p135
        $region30: #{masklm_forward.1} parent=11 // pred_check_branch
          %251 = sbr.rel (%p249) target = $region32
        $region31: #{masklm_forward.1} parent=11 // pred_region
          _
        $region32: #{masklm_forward.1} parent=11 // pred_fallthru
          _
      $region12: #{masklm_forward.1} parent=5 // pred_fallthru
        _
      %p252 = scmp.lt.s32.totalorder %s13, 2
      // Predicated region
      $region33: #{masklm_forward.1} parent=5 // pred_check
        %p253 = pneg %p252
      $region34: #{masklm_forward.1} parent=5 // pred_check_branch
        %255 = sbr.rel (%p253) target = $region36
      $region35: #{masklm_forward.1} parent=5 // pred_region
        // Predicated region
        $region37: #{masklm_forward.1} parent=35 // pred_check
          %p256 = pneg %p155
        $region38: #{masklm_forward.1} parent=35 // pred_check_branch
          %258 = sbr.rel (%p256) target = $region40
        $region39: #{masklm_forward.1} parent=35 // pred_region
          %s259 = sand.u32 %s145, 1
          %s260 = sand.u32 %s145, 1
          %s261 = smul.addr %s260, 64
          %s262 = scalar_lea.vmem [#allocation3], %s261
          %s263 = smul.addr %s21, 4
          %s264 = scalar_lea.vmem %s5, %s263
          // Predicated region
          $region41: #{masklm_forward.1} parent=39 // pred_check
            _
          $region42: #{masklm_forward.1} parent=39 // pred_check_branch
            %266 = sbr.rel (0) target = $region44
          $region43: #{masklm_forward.1} parent=39 // pred_region
            // Predicated region
            $region45: #{masklm_forward.1} parent=43 // pred_check
              _
            $region46: #{masklm_forward.1} parent=43 // pred_check_branch
              %268 = sbr.rel target = $region48
            $region47: #{masklm_forward.1} parent=43 // pred_region
              // Predicated region
              $region60: #{masklm_forward.1} parent=47 // pred_check
                _
              $region61: #{masklm_forward.1} parent=47 // pred_check_branch
                %313 = sbr.rel (0) target = $region63
              $region62: #{masklm_forward.1} parent=47 // pred_region
                loop: start=0, step=1, limit=1
                $region64: #{masklm_forward.1} parent=62 // loop_pre_header
                  _
                $region65: #{masklm_forward.1} parent=62 // loop_header
                  %s315 = sphi 0, %s319
                  %p316 = scmp.ge.s32.totalorder %s315, 1
                  %s320 = sphi %s264, %s264
                  %s321 = sphi %s262, %s262
                $region66: #{masklm_forward.1} parent=62 // loop_header_branch
                  %318 = sbr.rel (%p316) target = $region70
                $region67: #{masklm_forward.1} parent=62 // loop_body
                  _
                $region68: #{masklm_forward.1} parent=62 // loop_footer
                  %s319 = sadd.s32 1, %s315
                $region69: #{masklm_forward.1} parent=62 // loop_footer_branch
                  %314 = sbr.rel target = $region65
                $region70: #{masklm_forward.1} parent=62 // loop_exit
                  _
                loop: start=0, step=1, limit=1
                $region71: #{masklm_forward.1} parent=62 // loop_pre_header
                  _
                $region72: #{masklm_forward.1} parent=62 // loop_header
                  %s324 = sphi 0, %s328
                  %p325 = scmp.ge.s32.totalorder %s324, 1
                  %s329 = sphi %s264, %s264
                  %s330 = sphi %s262, %s262
                $region73: #{masklm_forward.1} parent=62 // loop_header_branch
                  %327 = sbr.rel (%p325) target = $region77
                $region74: #{masklm_forward.1} parent=62 // loop_body
                  %v331 = vld [vmem:[%s329] sm:$0xf]
                  %332 = vst [vmem:[%s330] sm:$0xf] %v331
                  %v333 = vld [vmem:[%s329 + $0x8] sm:$0xf]
                  %334 = vst [vmem:[%s330 + $0x4] sm:$0xf] %v333
                  %v335 = vld [vmem:[%s329 + $0x10] sm:$0xf]
                  %336 = vst [vmem:[%s330 + $0x8] sm:$0xf] %v335
                  %v337 = vld [vmem:[%s329 + $0x18] sm:$0xf]
                  %338 = vst [vmem:[%s330 + $0xc] sm:$0xf] %v337
                  %v339 = vld [vmem:[%s329 + $0x20] sm:$0xf]
                  %340 = vst [vmem:[%s330 + $0x10] sm:$0xf] %v339
                  %v341 = vld [vmem:[%s329 + $0x28] sm:$0xf]
                  %342 = vst [vmem:[%s330 + $0x14] sm:$0xf] %v341
                  %v343 = vld [vmem:[%s329 + $0x30] sm:$0xf]
                  %344 = vst [vmem:[%s330 + $0x18] sm:$0xf] %v343
                  %v345 = vld [vmem:[%s329 + $0x38] sm:$0xf]
                  %346 = vst [vmem:[%s330 + $0x1c] sm:$0xf] %v345
                  %v347 = vld [vmem:[%s329 + $0x40] sm:$0xf]
                  %348 = vst [vmem:[%s330 + $0x20] sm:$0xf] %v347
                  %v349 = vld [vmem:[%s329 + $0x48] sm:$0xf]
                  %350 = vst [vmem:[%s330 + $0x24] sm:$0xf] %v349
                  %v351 = vld [vmem:[%s329 + $0x50] sm:$0xf]
                  %352 = vst [vmem:[%s330 + $0x28] sm:$0xf] %v351
                  %v353 = vld [vmem:[%s329 + $0x58] sm:$0xf]
                  %354 = vst [vmem:[%s330 + $0x2c] sm:$0xf] %v353
                  %v355 = vld [vmem:[%s329 + $0x60] sm:$0xf]
                  %356 = vst [vmem:[%s330 + $0x30] sm:$0xf] %v355
                  %v357 = vld [vmem:[%s329 + $0x68] sm:$0xf]
                  %358 = vst [vmem:[%s330 + $0x34] sm:$0xf] %v357
                  %v359 = vld [vmem:[%s329 + $0x70] sm:$0xf]
                  %360 = vst [vmem:[%s330 + $0x38] sm:$0xf] %v359
                  %v361 = vld [vmem:[%s329 + $0x78] sm:$0xf]
                  %362 = vst [vmem:[%s330 + $0x3c] sm:$0xf] %v361
                $region75: #{masklm_forward.1} parent=62 // loop_footer
                  %s328 = sadd.s32 1, %s324
                $region76: #{masklm_forward.1} parent=62 // loop_footer_branch
                  %323 = sbr.rel target = $region72
                $region77: #{masklm_forward.1} parent=62 // loop_exit
                  _
              $region63: #{masklm_forward.1} parent=47 // pred_fallthru
                _
            $region48: #{masklm_forward.1} parent=43 // pred_fallthru
              _
            // Predicated region
            $region49: #{masklm_forward.1} parent=43 // pred_check
              _
            $region50: #{masklm_forward.1} parent=43 // pred_check_branch
              %270 = sbr.rel (0) target = $region52
            $region51: #{masklm_forward.1} parent=43 // pred_region
              loop: start=0, step=1, limit=1
              $region53: #{masklm_forward.1} parent=51 // loop_pre_header
                _
              $region54: #{masklm_forward.1} parent=51 // loop_header
                %s273 = sphi 0, %s277
                %p274 = scmp.ge.s32.totalorder %s273, 1
                %s278 = sphi %s264, %s264
                %s279 = sphi %s262, %s262
              $region55: #{masklm_forward.1} parent=51 // loop_header_branch
                %276 = sbr.rel (%p274) target = $region59
              $region56: #{masklm_forward.1} parent=51 // loop_body
                %v280 = vld [vmem:[%s278] sm:$0xf]
                %281 = vst [vmem:[%s279] sm:$0xf] %v280
                %v282 = vld [vmem:[%s278 + $0x8] sm:$0xf]
                %283 = vst [vmem:[%s279 + $0x4] sm:$0xf] %v282
                %v284 = vld [vmem:[%s278 + $0x10] sm:$0xf]
                %285 = vst [vmem:[%s279 + $0x8] sm:$0xf] %v284
                %v286 = vld [vmem:[%s278 + $0x18] sm:$0xf]
                %287 = vst [vmem:[%s279 + $0xc] sm:$0xf] %v286
                %v288 = vld [vmem:[%s278 + $0x20] sm:$0xf]
                %289 = vst [vmem:[%s279 + $0x10] sm:$0xf] %v288
                %v290 = vld [vmem:[%s278 + $0x28] sm:$0xf]
                %291 = vst [vmem:[%s279 + $0x14] sm:$0xf] %v290
                %v292 = vld [vmem:[%s278 + $0x30] sm:$0xf]
                %293 = vst [vmem:[%s279 + $0x18] sm:$0xf] %v292
                %v294 = vld [vmem:[%s278 + $0x38] sm:$0xf]
                %295 = vst [vmem:[%s279 + $0x1c] sm:$0xf] %v294
                %v296 = vld [vmem:[%s278 + $0x40] sm:$0xf]
                %297 = vst [vmem:[%s279 + $0x20] sm:$0xf] %v296
                %v298 = vld [vmem:[%s278 + $0x48] sm:$0xf]
                %299 = vst [vmem:[%s279 + $0x24] sm:$0xf] %v298
                %v300 = vld [vmem:[%s278 + $0x50] sm:$0xf]
                %301 = vst [vmem:[%s279 + $0x28] sm:$0xf] %v300
                %v302 = vld [vmem:[%s278 + $0x58] sm:$0xf]
                %303 = vst [vmem:[%s279 + $0x2c] sm:$0xf] %v302
                %v304 = vld [vmem:[%s278 + $0x60] sm:$0xf]
                %305 = vst [vmem:[%s279 + $0x30] sm:$0xf] %v304
                %v306 = vld [vmem:[%s278 + $0x68] sm:$0xf]
                %307 = vst [vmem:[%s279 + $0x34] sm:$0xf] %v306
                %v308 = vld [vmem:[%s278 + $0x70] sm:$0xf]
                %309 = vst [vmem:[%s279 + $0x38] sm:$0xf] %v308
                %v310 = vld [vmem:[%s278 + $0x78] sm:$0xf]
                %311 = vst [vmem:[%s279 + $0x3c] sm:$0xf] %v310
              $region57: #{masklm_forward.1} parent=51 // loop_footer
                %s277 = sadd.s32 1, %s273
              $region58: #{masklm_forward.1} parent=51 // loop_footer_branch
                %272 = sbr.rel target = $region54
              $region59: #{masklm_forward.1} parent=51 // loop_exit
                _
            $region52: #{masklm_forward.1} parent=43 // pred_fallthru
              _
          $region44: #{masklm_forward.1} parent=39 // pred_fallthru
            _
          %363 = vnop
        $region40: #{masklm_forward.1} parent=35 // pred_fallthru
          _
        // Predicated region
        $region78: #{masklm_forward.1} parent=35 // pred_check
          %p364 = pneg %p181
        $region79: #{masklm_forward.1} parent=35 // pred_check_branch
          %366 = sbr.rel (%p364) target = $region81
        $region80: #{masklm_forward.1} parent=35 // pred_region
          %p367 = scmp.lt.s32.totalorder %s21, 1
          %s368 = scalar_select %p367, %s21, 1
          %s369 = scalar_lea.vmem %s6, %s368
        $region81: #{masklm_forward.1} parent=35 // pred_fallthru
          _
      $region36: #{masklm_forward.1} parent=5 // pred_fallthru
        _
      %p370 = scmp.le.s32.totalorder 1, %s13
      %p371 = scmp.lt.s32.totalorder %s13, 3
      %p372 = pnand %p370, %p371
      %p373 = pneg %p372
      // Predicated region
      $region82: #{masklm_forward.1} parent=5 // pred_check
        _
      $region83: #{masklm_forward.1} parent=5 // pred_check_branch
        %375 = sbr.rel (%p372) target = $region85
      $region84: #{masklm_forward.1} parent=5 // pred_region
        %s376 = ssub.s32 %s13, 1
        %s377 = sand.u32 %s148, 1
        %s378 = sand.u32 %s148, 1
        %s379 = smul.addr %s378, 64
        %s380 = scalar_lea.vmem [#allocation3], %s379
        // Predicated region
        $region86: #{masklm_forward.1} parent=84 // pred_check
          %p381 = pneg %p161
        $region87: #{masklm_forward.1} parent=84 // pred_check_branch
          %383 = sbr.rel (%p381) target = $region89
        $region88: #{masklm_forward.1} parent=84 // pred_region
          _
        $region89: #{masklm_forward.1} parent=84 // pred_fallthru
          _
        %s384 = smul.u32 2, %s22
        %p385 = scmp.lt.s32.totalorder %s384, 1
        %s386 = scalar_select %p385, %s384, 1
        %s387 = smul.addr %s386, 6
        %s388 = smul.addr %s387, 4
        %s389 = scalar_lea.vmem %s0, %s388
        %p390 = pneg %p51
        %p391 = pneg %p48
        %p392 = pneg %p72
        %p393 = pneg %p69
        %p394 = pneg %p93
        %p395 = pneg %p90
        %p396 = pneg %p114
        %p397 = pneg %p111
        %p398 = pneg %p135
        %p399 = pneg %p132
        %s400 = sand.u32 %s148, 1
        %s401 = sand.u32 %s148, 1
        %s402 = smul.addr %s401, 64
        %s403 = scalar_lea.vmem [#allocation3], %s402
        %p404 = pneg %p161
        %p405 = pneg %p158
        %p406 = scmp.lt.s32.totalorder %s23, 1
        %s407 = scalar_select %p406, %s23, 1
        %s408 = scalar_lea.vmem %s6, %s407
        %p409 = pneg %p187
        %p410 = pneg %p184
        %p411 = pneg %p215
        %p412 = pneg %p212
        %s413 = sand.u32 %s202, 1
        %s414 = sand.u32 %s202, 1
        %s415 = smul.addr %s414, 8
        %s416 = scalar_lea.vmem [#allocation4], %s415
        %s417 = smul.u32 2, %s22
        %p418 = scmp.lt.s32.totalorder %s417, 1
        %s419 = scalar_select %p418, %s417, 1
        %s420 = smul.addr %s419, 6
        %s421 = smul.addr %s420, 4
        %s422 = scalar_lea.vmem %s0, %s421
        %s423 = smul.u32 2, %s22
        %p424 = scmp.lt.s32.totalorder %s23, 1
        %s425 = scalar_select %p424, %s23, 1
        %s426 = scalar_lea.vmem %s6, %s425
        %s427 = smul.u32 2, %s22
        %p429 = scmp.eq.s32.totalorder %s23, 0
        // Predicated region
        $region90: #{masklm_forward.1} parent=84 // pred_check
          %p430 = pneg %p429
        $region91: #{masklm_forward.1} parent=84 // pred_check_branch
          %432 = sbr.rel (%p430) target = $region93
        $region92: #{masklm_forward.1} parent=84 // pred_region
          %v433 = vld [vmem:[%s422] sm:$0xff]
          %v434 = vld [vmem:[%s422 + $0x8] sm:$0xff]
          %v435 = vld [vmem:[%s422 + $0x10] sm:$0xff]
          %v436 = vld [vmem:[%s422 + $0x18] sm:$0xff]
          %v437 = vld [vmem:[%s422 + $0x20] sm:$0xff]
          %v438 = vld [vmem:[%s422 + $0x28] sm:$0xff]
          %v439 = vld [vmem:[%s1] sm:$0xf]
          %v440 = vld [vmem:[%s1 + $0x4] sm:$0xf]
          %v441 = vld [vmem:[%s1 + $0x8] sm:$0xf]
          %v442 = vld [vmem:[%s1 + $0xc] sm:$0xf]
          %v443 = vld [vmem:[%s1 + $0x10] sm:$0xf]
          %v444 = vld [vmem:[%s1 + $0x14] sm:$0xf]
          %v445 = vld [vmem:[%s1 + $0x18] sm:$0xf]
          %v446 = vld [vmem:[%s1 + $0x1c] sm:$0xf]
          %v447 = vld [vmem:[%s1 + $0x20] sm:$0xf]
          %v448 = vld [vmem:[%s1 + $0x24] sm:$0xf]
          %v449 = vld [vmem:[%s1 + $0x28] sm:$0xf]
          %v450 = vld [vmem:[%s1 + $0x2c] sm:$0xf]
          %v451 = vld [vmem:[%s1 + $0x30] sm:$0xf]
          %v452 = vld [vmem:[%s1 + $0x34] sm:$0xf]
          %v453 = vld [vmem:[%s1 + $0x38] sm:$0xf]
          %v454 = vld [vmem:[%s1 + $0x3c] sm:$0xf]
          %v455 = vld [vmem:[%s1 + $0x40] sm:$0xf]
          %v456 = vld [vmem:[%s1 + $0x44] sm:$0xf]
          %v457 = vld [vmem:[%s1 + $0x48] sm:$0xf]
          %v458 = vld [vmem:[%s1 + $0x4c] sm:$0xf]
          %v459 = vld [vmem:[%s1 + $0x50] sm:$0xf]
          %v460 = vld [vmem:[%s1 + $0x54] sm:$0xf]
          %v461 = vld [vmem:[%s1 + $0x58] sm:$0xf]
          %v462 = vld [vmem:[%s1 + $0x5c] sm:$0xf]
          %v463 = vld [vmem:[%s1 + $0x60] sm:$0xf]
          %v464 = vld [vmem:[%s1 + $0x64] sm:$0xf]
          %v465 = vld [vmem:[%s1 + $0x68] sm:$0xf]
          %v466 = vld [vmem:[%s1 + $0x6c] sm:$0xf]
          %v467 = vld [vmem:[%s1 + $0x70] sm:$0xf]
          %v468 = vld [vmem:[%s1 + $0x74] sm:$0xf]
          %v469 = vld [vmem:[%s1 + $0x78] sm:$0xf]
          %v470 = vld [vmem:[%s1 + $0x7c] sm:$0xf]
          %v471 = vld [vmem:[%s1 + $0x80] sm:$0xf]
          %v472 = vld [vmem:[%s1 + $0x84] sm:$0xf]
          %v473 = vld [vmem:[%s1 + $0x88] sm:$0xf]
          %v474 = vld [vmem:[%s1 + $0x8c] sm:$0xf]
          %v475 = vld [vmem:[%s1 + $0x90] sm:$0xf]
          %v476 = vld [vmem:[%s1 + $0x94] sm:$0xf]
          %v477 = vld [vmem:[%s1 + $0x98] sm:$0xf]
          %v478 = vld [vmem:[%s1 + $0x9c] sm:$0xf]
          %v479 = vld [vmem:[%s1 + $0xa0] sm:$0xf]
          %v480 = vld [vmem:[%s1 + $0xa4] sm:$0xf]
          %v481 = vld [vmem:[%s1 + $0xa8] sm:$0xf]
          %v482 = vld [vmem:[%s1 + $0xac] sm:$0xf]
          %v483 = vld [vmem:[%s1 + $0xb0] sm:$0xf]
          %v484 = vld [vmem:[%s1 + $0xb4] sm:$0xf]
          %v485 = vld [vmem:[%s1 + $0xb8] sm:$0xf]
          %v486 = vld [vmem:[%s1 + $0xbc] sm:$0xf]
          %v487 = vld [vmem:[%s1 + $0xc0] sm:$0xf]
          %v488 = vld [vmem:[%s1 + $0xc4] sm:$0xf]
          %v489 = vld [vmem:[%s1 + $0xc8] sm:$0xf]
          %v490 = vld [vmem:[%s1 + $0xcc] sm:$0xf]
          %v491 = vld [vmem:[%s1 + $0xd0] sm:$0xf]
          %v492 = vld [vmem:[%s1 + $0xd4] sm:$0xf]
          %v493 = vld [vmem:[%s1 + $0xd8] sm:$0xf]
          %v494 = vld [vmem:[%s1 + $0xdc] sm:$0xf]
          %v495 = vld [vmem:[%s1 + $0xe0] sm:$0xf]
          %v496 = vld [vmem:[%s1 + $0xe4] sm:$0xf]
          %v497 = vld [vmem:[%s1 + $0xe8] sm:$0xf]
          %v498 = vld [vmem:[%s1 + $0xec] sm:$0xf]
          %v499 = vld [vmem:[%s1 + $0xf0] sm:$0xf]
          %v500 = vld [vmem:[%s1 + $0xf4] sm:$0xf]
          %v501 = vld [vmem:[%s1 + $0xf8] sm:$0xf]
          %v502 = vld [vmem:[%s1 + $0xfc] sm:$0xf]
          %v503 = vld [vmem:[%s1 + $0x100] sm:$0xf]
          %v504 = vld [vmem:[%s1 + $0x104] sm:$0xf]
          %v505 = vld [vmem:[%s1 + $0x108] sm:$0xf]
          %v506 = vld [vmem:[%s1 + $0x10c] sm:$0xf]
          %v507 = vld [vmem:[%s1 + $0x110] sm:$0xf]
          %v508 = vld [vmem:[%s1 + $0x114] sm:$0xf]
          %v509 = vld [vmem:[%s1 + $0x118] sm:$0xf]
          %v510 = vld [vmem:[%s1 + $0x11c] sm:$0xf]
          %v511 = vld [vmem:[%s1 + $0x120] sm:$0xf]
          %v512 = vld [vmem:[%s1 + $0x124] sm:$0xf]
          %v513 = vld [vmem:[%s1 + $0x128] sm:$0xf]
          %v514 = vld [vmem:[%s1 + $0x12c] sm:$0xf]
          %v515 = vld [vmem:[%s1 + $0x130] sm:$0xf]
          %v516 = vld [vmem:[%s1 + $0x134] sm:$0xf]
          %v517 = vld [vmem:[%s1 + $0x138] sm:$0xf]
          %v518 = vld [vmem:[%s1 + $0x13c] sm:$0xf]
          %v519 = vld [vmem:[%s1 + $0x140] sm:$0xf]
          %v520 = vld [vmem:[%s1 + $0x144] sm:$0xf]
          %v521 = vld [vmem:[%s1 + $0x148] sm:$0xf]
          %v522 = vld [vmem:[%s1 + $0x14c] sm:$0xf]
          %v523 = vld [vmem:[%s1 + $0x150] sm:$0xf]
          %v524 = vld [vmem:[%s1 + $0x154] sm:$0xf]
          %v525 = vld [vmem:[%s1 + $0x158] sm:$0xf]
          %v526 = vld [vmem:[%s1 + $0x15c] sm:$0xf]
          %v527 = vld [vmem:[%s1 + $0x160] sm:$0xf]
          %v528 = vld [vmem:[%s1 + $0x164] sm:$0xf]
          %v529 = vld [vmem:[%s1 + $0x168] sm:$0xf]
          %v530 = vld [vmem:[%s1 + $0x16c] sm:$0xf]
          %v531 = vld [vmem:[%s1 + $0x170] sm:$0xf]
          %v532 = vld [vmem:[%s1 + $0x174] sm:$0xf]
          %v533 = vld [vmem:[%s1 + $0x178] sm:$0xf]
          %v534 = vld [vmem:[%s1 + $0x17c] sm:$0xf]
          %v535 = vld [vmem:[%s2] sm:$0x1]
          %v537 = vlaneseq
          %v538 = vshrl.u32 %v537, 7
          %v539 = vsub.s32 0, %v538
          %v540 = vrot.slane %v535, %v539
          %v548 = vunpack.c.l.b16 %v433
          %v549 = vunpack.c.h.b16 %v433
          %v550 = vunpack.c.l.b16 %v434
          %v551 = vunpack.c.h.b16 %v434
          %v552 = vunpack.c.l.b16 %v435
          %v553 = vunpack.c.h.b16 %v435
          %v554 = vunpack.c.l.b16 %v436
          %v555 = vunpack.c.h.b16 %v436
          %v556 = vunpack.c.l.b16 %v437
          %v557 = vunpack.c.h.b16 %v437
          %v558 = vunpack.c.l.b16 %v438
          %v559 = vunpack.c.h.b16 %v438
          %v560 = vpack.c.b16 %v554, %v548
          %v561 = vpack.c.b16 %v555, %v549
          %v562 = vpack.c.b16 %v556, %v550
          %v563 = vpack.c.b16 %v557, %v551
          %v564 = vpack.c.b16 %v558, %v552
          %v565 = vpack.c.b16 %v559, %v553
          %v668 = vunpack.c.l.b16 %v439
          %v669 = vunpack.c.l.b16 %v440
          %v670 = vunpack.c.l.b16 %v441
          %v671 = vunpack.c.l.b16 %v442
          %v672 = vunpack.c.l.b16 %v443
          %v673 = vunpack.c.l.b16 %v444
          %v674 = vunpack.c.l.b16 %v445
          %v675 = vunpack.c.l.b16 %v446
          %v676 = vunpack.c.l.b16 %v447
          %v677 = vunpack.c.l.b16 %v448
          %v678 = vunpack.c.l.b16 %v449
          %v679 = vunpack.c.l.b16 %v450
          %v680 = vunpack.c.l.b16 %v451
          %v681 = vunpack.c.l.b16 %v452
          %v682 = vunpack.c.l.b16 %v453
          %v683 = vunpack.c.l.b16 %v454
          %v684 = vunpack.c.l.b16 %v455
          %v685 = vunpack.c.l.b16 %v456
          %v686 = vunpack.c.l.b16 %v457
          %v687 = vunpack.c.l.b16 %v458
          %v688 = vunpack.c.l.b16 %v459
          %v689 = vunpack.c.l.b16 %v460
          %v690 = vunpack.c.l.b16 %v461
          %v691 = vunpack.c.l.b16 %v462
          %v692 = vunpack.c.l.b16 %v463
          %v693 = vunpack.c.l.b16 %v464
          %v694 = vunpack.c.l.b16 %v465
          %v695 = vunpack.c.l.b16 %v466
          %v696 = vunpack.c.l.b16 %v467
          %v697 = vunpack.c.l.b16 %v468
          %v698 = vunpack.c.l.b16 %v469
          %v699 = vunpack.c.l.b16 %v470
          %v700 = vunpack.c.l.b16 %v471
          %v701 = vunpack.c.l.b16 %v472
          %v702 = vunpack.c.l.b16 %v473
          %v703 = vunpack.c.l.b16 %v474
          %v704 = vunpack.c.l.b16 %v475
          %v705 = vunpack.c.l.b16 %v476
          %v706 = vunpack.c.l.b16 %v477
          %v707 = vunpack.c.l.b16 %v478
          %v708 = vunpack.c.l.b16 %v479
          %v709 = vunpack.c.l.b16 %v480
          %v710 = vunpack.c.l.b16 %v481
          %v711 = vunpack.c.l.b16 %v482
          %v712 = vunpack.c.l.b16 %v483
          %v713 = vunpack.c.l.b16 %v484
          %v714 = vunpack.c.l.b16 %v485
          %v715 = vunpack.c.l.b16 %v486
          %v716 = vunpack.c.l.b16 %v487
          %v717 = vunpack.c.l.b16 %v488
          %v718 = vunpack.c.l.b16 %v489
          %v719 = vunpack.c.l.b16 %v490
          %v720 = vunpack.c.l.b16 %v491
          %v721 = vunpack.c.l.b16 %v492
          %v722 = vunpack.c.l.b16 %v493
          %v723 = vunpack.c.l.b16 %v494
          %v724 = vunpack.c.l.b16 %v495
          %v725 = vunpack.c.l.b16 %v496
          %v726 = vunpack.c.l.b16 %v497
          %v727 = vunpack.c.l.b16 %v498
          %v728 = vunpack.c.l.b16 %v499
          %v729 = vunpack.c.l.b16 %v500
          %v730 = vunpack.c.l.b16 %v501
          %v731 = vunpack.c.l.b16 %v502
          %v732 = vunpack.c.l.b16 %v503
          %v733 = vunpack.c.l.b16 %v504
          %v734 = vunpack.c.l.b16 %v505
          %v735 = vunpack.c.l.b16 %v506
          %v736 = vunpack.c.l.b16 %v507
          %v737 = vunpack.c.l.b16 %v508
          %v738 = vunpack.c.l.b16 %v509
          %v739 = vunpack.c.l.b16 %v510
          %v740 = vunpack.c.l.b16 %v511
          %v741 = vunpack.c.l.b16 %v512
          %v742 = vunpack.c.l.b16 %v513
          %v743 = vunpack.c.l.b16 %v514
          %v744 = vunpack.c.l.b16 %v515
          %v745 = vunpack.c.l.b16 %v516
          %v746 = vunpack.c.l.b16 %v517
          %v747 = vunpack.c.l.b16 %v518
          %v748 = vunpack.c.l.b16 %v519
          %v749 = vunpack.c.l.b16 %v520
          %v750 = vunpack.c.l.b16 %v521
          %v751 = vunpack.c.l.b16 %v522
          %v752 = vunpack.c.l.b16 %v523
          %v753 = vunpack.c.l.b16 %v524
          %v754 = vunpack.c.l.b16 %v525
          %v755 = vunpack.c.l.b16 %v526
          %v756 = vunpack.c.l.b16 %v527
          %v757 = vunpack.c.l.b16 %v528
          %v758 = vunpack.c.l.b16 %v529
          %v759 = vunpack.c.l.b16 %v530
          %v760 = vunpack.c.l.b16 %v531
          %v761 = vunpack.c.l.b16 %v532
          %v762 = vunpack.c.l.b16 %v533
          %v763 = vunpack.c.l.b16 %v534
          %v764 = vpack.c.b16 %v669, %v668
          %v765 = vpack.c.b16 %v671, %v670
          %v766 = vpack.c.b16 %v673, %v672
          %v767 = vpack.c.b16 %v675, %v674
          %v768 = vpack.c.b16 %v677, %v676
          %v769 = vpack.c.b16 %v679, %v678
          %v770 = vpack.c.b16 %v681, %v680
          %v771 = vpack.c.b16 %v683, %v682
          %v772 = vpack.c.b16 %v685, %v684
          %v773 = vpack.c.b16 %v687, %v686
          %v774 = vpack.c.b16 %v689, %v688
          %v775 = vpack.c.b16 %v691, %v690
          %v776 = vpack.c.b16 %v693, %v692
          %v777 = vpack.c.b16 %v695, %v694
          %v778 = vpack.c.b16 %v697, %v696
          %v779 = vpack.c.b16 %v699, %v698
          %v780 = vpack.c.b16 %v701, %v700
          %v781 = vpack.c.b16 %v703, %v702
          %v782 = vpack.c.b16 %v705, %v704
          %v783 = vpack.c.b16 %v707, %v706
          %v784 = vpack.c.b16 %v709, %v708
          %v785 = vpack.c.b16 %v711, %v710
          %v786 = vpack.c.b16 %v713, %v712
          %v787 = vpack.c.b16 %v715, %v714
          %v788 = vpack.c.b16 %v717, %v716
          %v789 = vpack.c.b16 %v719, %v718
          %v790 = vpack.c.b16 %v721, %v720
          %v791 = vpack.c.b16 %v723, %v722
          %v792 = vpack.c.b16 %v725, %v724
          %v793 = vpack.c.b16 %v727, %v726
          %v794 = vpack.c.b16 %v729, %v728
          %v795 = vpack.c.b16 %v731, %v730
          %v796 = vpack.c.b16 %v733, %v732
          %v797 = vpack.c.b16 %v735, %v734
          %v798 = vpack.c.b16 %v737, %v736
          %v799 = vpack.c.b16 %v739, %v738
          %v800 = vpack.c.b16 %v741, %v740
          %v801 = vpack.c.b16 %v743, %v742
          %v802 = vpack.c.b16 %v745, %v744
          %v803 = vpack.c.b16 %v747, %v746
          %v804 = vpack.c.b16 %v749, %v748
          %v805 = vpack.c.b16 %v751, %v750
          %v806 = vpack.c.b16 %v753, %v752
          %v807 = vpack.c.b16 %v755, %v754
          %v808 = vpack.c.b16 %v757, %v756
          %v809 = vpack.c.b16 %v759, %v758
          %v810 = vpack.c.b16 %v761, %v760
          %v811 = vpack.c.b16 %v763, %v762
          %860 = vmatprep.subr.bf16.mxu0 0
          %861 = vmatpush1.bf16.msra.mxu0 %v764
          %862 = vmatprep.subr.bf16.mxu0 0
          %863 = vmatpush1.bf16.msra.mxu0 %v765
          %864 = vmatprep.subr.bf16.mxu0 0
          %865 = vmatpush1.bf16.msra.mxu0 %v766
          %866 = vmatprep.subr.bf16.mxu0 0
          %867 = vmatpush1.bf16.msra.mxu0 %v767
          %868 = vmatprep.subr.bf16.mxu0 0
          %869 = vmatpush1.bf16.msra.mxu0 %v768
          %870 = vmatprep.subr.bf16.mxu0 0
          %871 = vmatpush1.bf16.msra.mxu0 %v769
          %872 = vmatprep.subr.bf16.mxu0 0
          %873 = vmatpush1.bf16.msra.mxu0 %v770
          %874 = vmatprep.subr.bf16.mxu0 0
          %875 = vmatpush1.bf16.msra.mxu0 %v771
          %876 = vmatprep.subr.bf16.mxu0 0
          %877 = vmatpush1.bf16.msra.mxu0 %v772
          %878 = vmatprep.subr.bf16.mxu0 0
          %879 = vmatpush1.bf16.msra.mxu0 %v773
          %880 = vmatprep.subr.bf16.mxu0 0
          %881 = vmatpush1.bf16.msra.mxu0 %v774
          %882 = vmatprep.subr.bf16.mxu0 0
          %883 = vmatpush1.bf16.msra.mxu0 %v775
          %884 = vmatprep.subr.bf16.mxu0 0
          %885 = vmatpush1.bf16.msra.mxu0 %v776
          %886 = vmatprep.subr.bf16.mxu0 0
          %887 = vmatpush1.bf16.msra.mxu0 %v777
          %888 = vmatprep.subr.bf16.mxu0 0
          %889 = vmatpush1.bf16.msra.mxu0 %v778
          %890 = vmatprep.subr.bf16.mxu0 0
          %891 = vmatpush1.bf16.msra.mxu0 %v779
          %892 = vmatprep.mubr.bf16.mxu0 %v561
          %893 = vmatmul.mubr.bf16.gmra.mrb[0].mxu0 %v560
          %v894 = vpop.f32.mrb[0].mxu0
          %v895 = vadd.f32 %v540, %v894
          %v896 = vpop.f32.mrb[0].mxu0
          %v897 = vpop.f32.mrb[0].mxu0
          %v898 = vadd.f32 %v540, %v897
          %v899 = vpop.f32.mrb[0].mxu0
          %900 = vdwg.mxu0
          %901 = vmatprep.subr.bf16.mxu0 0
          %902 = vmatpush1.bf16.msra.mxu0 %v780
          %903 = vmatprep.subr.bf16.mxu0 0
          %904 = vmatpush1.bf16.msra.mxu0 %v781
          %905 = vmatprep.subr.bf16.mxu0 0
          %906 = vmatpush1.bf16.msra.mxu0 %v782
          %907 = vmatprep.subr.bf16.mxu0 0
          %908 = vmatpush1.bf16.msra.mxu0 %v783
          %909 = vmatprep.subr.bf16.mxu0 0
          %910 = vmatpush1.bf16.msra.mxu0 %v784
          %911 = vmatprep.subr.bf16.mxu0 0
          %912 = vmatpush1.bf16.msra.mxu0 %v785
          %913 = vmatprep.subr.bf16.mxu0 0
          %914 = vmatpush1.bf16.msra.mxu0 %v786
          %915 = vmatprep.subr.bf16.mxu0 0
          %916 = vmatpush1.bf16.msra.mxu0 %v787
          %917 = vmatprep.subr.bf16.mxu0 0
          %918 = vmatpush1.bf16.msra.mxu0 %v788
          %919 = vmatprep.subr.bf16.mxu0 0
          %920 = vmatpush1.bf16.msra.mxu0 %v789
          %921 = vmatprep.subr.bf16.mxu0 0
          %922 = vmatpush1.bf16.msra.mxu0 %v790
          %923 = vmatprep.subr.bf16.mxu0 0
          %924 = vmatpush1.bf16.msra.mxu0 %v791
          %925 = vmatprep.subr.bf16.mxu0 0
          %926 = vmatpush1.bf16.msra.mxu0 %v792
          %927 = vmatprep.subr.bf16.mxu0 0
          %928 = vmatpush1.bf16.msra.mxu0 %v793
          %929 = vmatprep.subr.bf16.mxu0 0
          %930 = vmatpush1.bf16.msra.mxu0 %v794
          %931 = vmatprep.subr.bf16.mxu0 0
          %932 = vmatpush1.bf16.msra.mxu0 %v795
          %933 = vmatprep.mubr.bf16.mxu0 %v563
          %934 = vmatmul.mubr.bf16.gmra.mrb[0].mxu0 %v562
          %v935 = vpop.f32.mrb[0].mxu0
          %v936 = vadd.f32 %v895, %v935
          %v937 = vpop.f32.mrb[0].mxu0
          %v938 = vpop.f32.mrb[0].mxu0
          %v939 = vadd.f32 %v898, %v938
          %v940 = vpop.f32.mrb[0].mxu0
          %941 = vdwg.mxu0
          %942 = vmatprep.subr.bf16.mxu0 0
          %943 = vmatpush1.bf16.msra.mxu0 %v796
          %944 = vmatprep.subr.bf16.mxu0 0
          %945 = vmatpush1.bf16.msra.mxu0 %v797
          %946 = vmatprep.subr.bf16.mxu0 0
          %947 = vmatpush1.bf16.msra.mxu0 %v798
          %948 = vmatprep.subr.bf16.mxu0 0
          %949 = vmatpush1.bf16.msra.mxu0 %v799
          %950 = vmatprep.subr.bf16.mxu0 0
          %951 = vmatpush1.bf16.msra.mxu0 %v800
          %952 = vmatprep.subr.bf16.mxu0 0
          %953 = vmatpush1.bf16.msra.mxu0 %v801
          %954 = vmatprep.subr.bf16.mxu0 0
          %955 = vmatpush1.bf16.msra.mxu0 %v802
          %956 = vmatprep.subr.bf16.mxu0 0
          %957 = vmatpush1.bf16.msra.mxu0 %v803
          %958 = vmatprep.subr.bf16.mxu0 0
          %959 = vmatpush1.bf16.msra.mxu0 %v804
          %960 = vmatprep.subr.bf16.mxu0 0
          %961 = vmatpush1.bf16.msra.mxu0 %v805
          %962 = vmatprep.subr.bf16.mxu0 0
          %963 = vmatpush1.bf16.msra.mxu0 %v806
          %964 = vmatprep.subr.bf16.mxu0 0
          %965 = vmatpush1.bf16.msra.mxu0 %v807
          %966 = vmatprep.subr.bf16.mxu0 0
          %967 = vmatpush1.bf16.msra.mxu0 %v808
          %968 = vmatprep.subr.bf16.mxu0 0
          %969 = vmatpush1.bf16.msra.mxu0 %v809
          %970 = vmatprep.subr.bf16.mxu0 0
          %971 = vmatpush1.bf16.msra.mxu0 %v810
          %972 = vmatprep.subr.bf16.mxu0 0
          %973 = vmatpush1.bf16.msra.mxu0 %v811
          %974 = vmatprep.mubr.bf16.mxu0 %v565
          %975 = vmatmul.mubr.bf16.gmra.mrb[0].mxu0 %v564
          %v976 = vpop.f32.mrb[0].mxu0
          %v977 = vadd.f32 %v936, %v976
          %v978 = vpop.f32.mrb[0].mxu0
          %v979 = vpop.f32.mrb[0].mxu0
          %v980 = vadd.f32 %v939, %v979
          %v981 = vpop.f32.mrb[0].mxu0
          %982 = vdwg.mxu0
          %v983 = vmax.f32 %v977, 0.0
          %v984 = vmax.f32 %v980, 0.0
          %985 = vadd.xlane.f32.xlu0 %v983
          %v986 = vpop.xlane.xlu0 %985
          %987 = vadd.xlane.f32.xlu0 %v984
          %v988 = vpop.xlane.xlu0 %987
          %v989 = vrcp.pop 128.0
          %v990 = vmul.f32 %v986, %v989
          %v991 = vmul.f32 %v988, %v989
          %v992 = vsub.f32 %v983, %v990
          %v993 = vsub.f32 %v984, %v991
          %v994 = vmul.f32 %v992, %v992
          %v995 = vmul.f32 %v993, %v993
          %996 = vadd.xlane.f32.xlu0 %v994
          %v997 = vpop.xlane.xlu0 %996
          %998 = vadd.xlane.f32.xlu0 %v995
          %v999 = vpop.xlane.xlu0 %998
          %v1000 = vmul.f32 %v997, %v989
          %v1001 = vmul.f32 %v999, %v989
          %v1002 = vadd.f32 %v1000, 1e-05
          %v1003 = vadd.f32 %v1001, 1e-05
          %v1004 = vrsqrt.pop %v1002
          %v1005 = vrsqrt.pop %v1003
          %v1006 = vmul.f32 %v992, %v1004
          %v1007 = vmul.f32 %v993, %v1005
          %v1008 = vld [vmem:[%s3] sm:$0x1]
          %v1010 = vlaneseq
          %v1011 = vshrl.u32 %v1010, 7
          %v1012 = vsub.s32 0, %v1011
          %v1013 = vrot.slane %v1008, %v1012
          %v1015 = vmul.f32 %v1006, %v1013
          %v1016 = vmul.f32 %v1007, %v1013
          %v1017 = vld [vmem:[%s4] sm:$0x1]
          %v1019 = vlaneseq
          %v1020 = vshrl.u32 %v1019, 7
          %v1021 = vsub.s32 0, %v1020
          %v1022 = vrot.slane %v1017, %v1021
          %v1024 = vadd.f32 %v1015, %v1022
          %v1025 = vadd.f32 %v1016, %v1022
          %v1026 = vpack.c.bf16 %v1025, %v1024
          %1027 = vst [vmem:[#allocation2] sm:$0xff] %v1026
        $region93: #{masklm_forward.1} parent=84 // pred_fallthru
          _
        %v1028 = vld [vmem:[#allocation2] sm:$0xff]
        %v1029 = vld [vmem:[%s380] sm:$0xf]
        %v1030 = vld [vmem:[%s380 + $0x4] sm:$0xf]
        %v1031 = vld [vmem:[%s380 + $0x8] sm:$0xf]
        %v1032 = vld [vmem:[%s380 + $0xc] sm:$0xf]
        %v1033 = vld [vmem:[%s380 + $0x10] sm:$0xf]
        %v1034 = vld [vmem:[%s380 + $0x14] sm:$0xf]
        %v1035 = vld [vmem:[%s380 + $0x18] sm:$0xf]
        %v1036 = vld [vmem:[%s380 + $0x1c] sm:$0xf]
        %v1037 = vld [vmem:[%s380 + $0x20] sm:$0xf]
        %v1038 = vld [vmem:[%s380 + $0x24] sm:$0xf]
        %v1039 = vld [vmem:[%s380 + $0x28] sm:$0xf]
        %v1040 = vld [vmem:[%s380 + $0x2c] sm:$0xf]
        %v1041 = vld [vmem:[%s380 + $0x30] sm:$0xf]
        %v1042 = vld [vmem:[%s380 + $0x34] sm:$0xf]
        %v1043 = vld [vmem:[%s380 + $0x38] sm:$0xf]
        %v1044 = vld [vmem:[%s380 + $0x3c] sm:$0xf]
        %v1045 = vld [vmem:[%s426] sm:$0x1]
        %v1047 = vlaneseq
        %v1048 = vshrl.u32 %v1047, 7
        %v1049 = vsub.s32 0, %v1048
        %v1050 = vrot.slane %v1045, %v1049
        %v1068 = vunpack.c.l.b16 %v1029
        %v1069 = vunpack.c.l.b16 %v1030
        %v1070 = vunpack.c.l.b16 %v1031
        %v1071 = vunpack.c.l.b16 %v1032
        %v1072 = vunpack.c.l.b16 %v1033
        %v1073 = vunpack.c.l.b16 %v1034
        %v1074 = vunpack.c.l.b16 %v1035
        %v1075 = vunpack.c.l.b16 %v1036
        %v1076 = vunpack.c.l.b16 %v1037
        %v1077 = vunpack.c.l.b16 %v1038
        %v1078 = vunpack.c.l.b16 %v1039
        %v1079 = vunpack.c.l.b16 %v1040
        %v1080 = vunpack.c.l.b16 %v1041
        %v1081 = vunpack.c.l.b16 %v1042
        %v1082 = vunpack.c.l.b16 %v1043
        %v1083 = vunpack.c.l.b16 %v1044
        %v1084 = vpack.c.b16 %v1069, %v1068
        %v1085 = vpack.c.b16 %v1071, %v1070
        %v1086 = vpack.c.b16 %v1073, %v1072
        %v1087 = vpack.c.b16 %v1075, %v1074
        %v1088 = vpack.c.b16 %v1077, %v1076
        %v1089 = vpack.c.b16 %v1079, %v1078
        %v1090 = vpack.c.b16 %v1081, %v1080
        %v1091 = vpack.c.b16 %v1083, %v1082
        %1100 = vmatprep.subr.bf16.mxu0 0
        %1101 = vmatpush1.bf16.msra.mxu0 %v1084
        %1102 = vmatprep.subr.bf16.mxu0 0
        %1103 = vmatpush1.bf16.msra.mxu0 %v1085
        %1104 = vmatprep.subr.bf16.mxu0 0
        %1105 = vmatpush1.bf16.msra.mxu0 %v1086
        %1106 = vmatprep.subr.bf16.mxu0 0
        %1107 = vmatpush1.bf16.msra.mxu0 %v1087
        %1108 = vmatprep.subr.bf16.mxu0 0
        %1109 = vmatpush1.bf16.msra.mxu0 %v1088
        %1110 = vmatprep.subr.bf16.mxu0 0
        %1111 = vmatpush1.bf16.msra.mxu0 %v1089
        %1112 = vmatprep.subr.bf16.mxu0 0
        %1113 = vmatpush1.bf16.msra.mxu0 %v1090
        %1114 = vmatprep.subr.bf16.mxu0 0
        %1115 = vmatpush1.bf16.msra.mxu0 %v1091
        %1116 = vmatprep.subr.bf16.mxu0 0
        %1117 = vmatpush1.bf16.msra.mxu0 0
        %1118 = vmatprep.subr.bf16.mxu0 0
        %1119 = vmatpush1.bf16.msra.mxu0 0
        %1120 = vmatprep.subr.bf16.mxu0 0
        %1121 = vmatpush1.bf16.msra.mxu0 0
        %1122 = vmatprep.subr.bf16.mxu0 0
        %1123 = vmatpush1.bf16.msra.mxu0 0
        %1124 = vmatprep.subr.bf16.mxu0 0
        %1125 = vmatpush1.bf16.msra.mxu0 0
        %1126 = vmatprep.subr.bf16.mxu0 0
        %1127 = vmatpush1.bf16.msra.mxu0 0
        %1128 = vmatprep.subr.bf16.mxu0 0
        %1129 = vmatpush1.bf16.msra.mxu0 0
        %1130 = vmatprep.subr.bf16.mxu0 0
        %1131 = vmatpush1.bf16.msra.mxu0 0
        %1132 = vmatprep.mubr.bf16.mxu0 0
        %1133 = vmatmul.mubr.bf16.gmra.mrb[0].mxu0 %v1028
        %v1134 = vpop.f32.mrb[0].mxu0
        %v1135 = vadd.f32 %v1050, %v1134
        %v1136 = vpop.f32.mrb[0].mxu0
        %v1137 = vpop.f32.mrb[0].mxu0
        %v1138 = vadd.f32 %v1050, %v1137
        %v1139 = vpop.f32.mrb[0].mxu0
        %1140 = vdwg.mxu0
        %v1141 = vpack.c.bf16 %v1138, %v1135
        %v1143 = vunpack.c.l.b16 %v1141
        %v1144 = vunpack.c.h.b16 %v1141
        %v1145 = vpack.c.b16 %v1143, %v1143
        %v1146 = vpack.c.b16 %v1144, %v1144
        %1149 = vst [vmem:[%s416] sm:$0xf] %v1145
        %1150 = vst [vmem:[%s416 + $0x4] sm:$0xf] %v1146
        %s1151 = sand.u32 %s202, 1
        %s1152 = sand.u32 %s202, 1
        %s1153 = smul.addr %s1152, 8
        %s1154 = scalar_lea.vmem [#allocation4], %s1153
        // Predicated region
        $region94: #{masklm_forward.1} parent=84 // pred_check
          %p1155 = pneg %p212
        $region95: #{masklm_forward.1} parent=84 // pred_check_branch
          %1157 = sbr.rel (%p1155) target = $region97
        $region96: #{masklm_forward.1} parent=84 // pred_region
          %s1158 = smul.u32 2, %s22
          %s1159 = smul.addr %s1158, 2
          %s1160 = sadd.s32 %s23, %s1159
          %s1161 = smul.addr %s1160, 4
          %s1162 = scalar_lea.vmem %s7, %s1161
          // Predicated region
          $region98: #{masklm_forward.1} parent=96 // pred_check
            _
          $region99: #{masklm_forward.1} parent=96 // pred_check_branch
            %1164 = sbr.rel (0) target = $region101
          $region100: #{masklm_forward.1} parent=96 // pred_region
            // Predicated region
            $region102: #{masklm_forward.1} parent=100 // pred_check
              _
            $region103: #{masklm_forward.1} parent=100 // pred_check_branch
              %1166 = sbr.rel target = $region105
            $region104: #{masklm_forward.1} parent=100 // pred_region
              // Predicated region
              $region117: #{masklm_forward.1} parent=104 // pred_check
                _
              $region118: #{masklm_forward.1} parent=104 // pred_check_branch
                %1183 = sbr.rel (0) target = $region120
              $region119: #{masklm_forward.1} parent=104 // pred_region
                loop: start=0, step=1, limit=1
                $region121: #{masklm_forward.1} parent=119 // loop_pre_header
                  _
                $region122: #{masklm_forward.1} parent=119 // loop_header
                  %s1185 = sphi 0, %s1189
                  %p1186 = scmp.ge.s32.totalorder %s1185, 1
                  %s1190 = sphi %s1154, %s1154
                  %s1191 = sphi %s1162, %s1162
                $region123: #{masklm_forward.1} parent=119 // loop_header_branch
                  %1188 = sbr.rel (%p1186) target = $region127
                $region124: #{masklm_forward.1} parent=119 // loop_body
                  _
                $region125: #{masklm_forward.1} parent=119 // loop_footer
                  %s1189 = sadd.s32 1, %s1185
                $region126: #{masklm_forward.1} parent=119 // loop_footer_branch
                  %1184 = sbr.rel target = $region122
                $region127: #{masklm_forward.1} parent=119 // loop_exit
                  _
                loop: start=0, step=1, limit=1
                $region128: #{masklm_forward.1} parent=119 // loop_pre_header
                  _
                $region129: #{masklm_forward.1} parent=119 // loop_header
                  %s1194 = sphi 0, %s1198
                  %p1195 = scmp.ge.s32.totalorder %s1194, 1
                  %s1199 = sphi %s1154, %s1154
                  %s1200 = sphi %s1162, %s1162
                $region130: #{masklm_forward.1} parent=119 // loop_header_branch
                  %1197 = sbr.rel (%p1195) target = $region134
                $region131: #{masklm_forward.1} parent=119 // loop_body
                  %v1201 = vld [vmem:[%s1199] sm:$0xf]
                  %1202 = vst [vmem:[%s1200] sm:$0xf] %v1201
                  %v1203 = vld [vmem:[%s1199 + $0x4] sm:$0xf]
                  %1204 = vst [vmem:[%s1200 + $0x8] sm:$0xf] %v1203
                $region132: #{masklm_forward.1} parent=119 // loop_footer
                  %s1198 = sadd.s32 1, %s1194
                $region133: #{masklm_forward.1} parent=119 // loop_footer_branch
                  %1193 = sbr.rel target = $region129
                $region134: #{masklm_forward.1} parent=119 // loop_exit
                  _
              $region120: #{masklm_forward.1} parent=104 // pred_fallthru
                _
            $region105: #{masklm_forward.1} parent=100 // pred_fallthru
              _
            // Predicated region
            $region106: #{masklm_forward.1} parent=100 // pred_check
              _
            $region107: #{masklm_forward.1} parent=100 // pred_check_branch
              %1168 = sbr.rel (0) target = $region109
            $region108: #{masklm_forward.1} parent=100 // pred_region
              loop: start=0, step=1, limit=1
              $region110: #{masklm_forward.1} parent=108 // loop_pre_header
                _
              $region111: #{masklm_forward.1} parent=108 // loop_header
                %s1171 = sphi 0, %s1175
                %p1172 = scmp.ge.s32.totalorder %s1171, 1
                %s1176 = sphi %s1154, %s1154
                %s1177 = sphi %s1162, %s1162
              $region112: #{masklm_forward.1} parent=108 // loop_header_branch
                %1174 = sbr.rel (%p1172) target = $region116
              $region113: #{masklm_forward.1} parent=108 // loop_body
                %v1178 = vld [vmem:[%s1176] sm:$0xf]
                %1179 = vst [vmem:[%s1177] sm:$0xf] %v1178
                %v1180 = vld [vmem:[%s1176 + $0x4] sm:$0xf]
                %1181 = vst [vmem:[%s1177 + $0x8] sm:$0xf] %v1180
              $region114: #{masklm_forward.1} parent=108 // loop_footer
                %s1175 = sadd.s32 1, %s1171
              $region115: #{masklm_forward.1} parent=108 // loop_footer_branch
                %1170 = sbr.rel target = $region111
              $region116: #{masklm_forward.1} parent=108 // loop_exit
                _
            $region109: #{masklm_forward.1} parent=100 // pred_fallthru
              _
          $region101: #{masklm_forward.1} parent=96 // pred_fallthru
            _
          %1205 = vnop
        $region97: #{masklm_forward.1} parent=84 // pred_fallthru
          _
      $region85: #{masklm_forward.1} parent=5 // pred_fallthru
        _
      %p1206 = scmp.le.s32.totalorder 2, %s13
      // Predicated region
      $region135: #{masklm_forward.1} parent=5 // pred_check
        %p1207 = pneg %p1206
      $region136: #{masklm_forward.1} parent=5 // pred_check_branch
        %1209 = sbr.rel (%p1207) target = $region138
      $region137: #{masklm_forward.1} parent=5 // pred_region
        %s1210 = ssub.s32 %s13, 2
        // Predicated region
        $region139: #{masklm_forward.1} parent=137 // pred_check
          %p1211 = pneg %p218
        $region140: #{masklm_forward.1} parent=137 // pred_check_branch
          %1213 = sbr.rel (%p1211) target = $region142
        $region141: #{masklm_forward.1} parent=137 // pred_region
          %s1214 = sand.u32 %s203, 1
          %s1215 = sand.u32 %s203, 1
          %s1216 = smul.addr %s1215, 8
          %s1217 = scalar_lea.vmem [#allocation4], %s1216
        $region142: #{masklm_forward.1} parent=137 // pred_fallthru
          _
      $region138: #{masklm_forward.1} parent=5 // pred_fallthru
        _
    $region6: #{masklm_forward.1} parent=1 // loop_footer
      %s17 = sadd.s32 1, %s13
    $region7: #{masklm_forward.1} parent=1 // loop_footer_branch
      %12 = sbr.rel target = $region3
    $region8: #{masklm_forward.1} parent=1 // loop_exit
      _

</llo_original>
